<compile_context>
chip_gen: v5e
topology: v5e:2x2
jax: 0.10.0
libtpu: 0.0.40
codegen_flags: <defaults>
</compile_context>

<pallas_src>
import jax
import jax.numpy as jnp
from jax import lax
from jax.experimental import pallas as pl
from jax.experimental.pallas import tpu as pltpu

LANE = 128
CHUNK_ROWS = 128                 # inner-loop chunk; multiple of every sublane pack
INPUT_BUFFER_BUDGET = 16 << 20   # bytes for 2 inputs x 2 pipeline buffers
VMEM_LIMIT_BYTES = 32 << 20      # safe scoped-VMEM on v5e / v6e / v7x


def _make_l1_partial_kernel(row_tile, chunk, valid_rows_last):
    """Build a kernel computing a per-grid-block (8,128) partial sum of |p - t|.

    All sizes are Python ints (static), so the overhang mask is only emitted
    for (and only executed by) the final, possibly overhanging, block.
    """
    assert row_tile % chunk == 0 and chunk % 8 == 0
    need_mask = valid_rows_last < row_tile
    n_full_chunks = row_tile // chunk
    n_last_chunks = -(-valid_rows_last // chunk)

    def partial_sum(p_ref, t_ref, n_chunks, mask_rows):
        def body(k, acc):
            off = pl.multiple_of(k * chunk, chunk)
            p = p_ref[pl.ds(off, chunk), :]
            t = t_ref[pl.ds(off, chunk), :]
            # Native-dtype subtract/abs (bf16-native on v6e/v7x); f32 accumulate.
            d = jnp.abs(p - t).astype(jnp.float32)
            if mask_rows is not None:
                # Only the last (overhanging) block pays this: 1 iota + cmp + select.
                ri = off + lax.broadcasted_iota(jnp.int32, (chunk, LANE), 0)
                d = jnp.where(ri < mask_rows, d, jnp.float32(0.0))
            # (chunk,128) -> (8,128): pure VALU chain of vreg adds, no cross-lane work.
            return acc + jnp.sum(d.reshape(chunk // 8, 8, LANE), axis=0)

        return lax.fori_loop(0, n_chunks, body,
                             jnp.zeros((8, LANE), jnp.float32),
                             unroll=min(4, n_chunks))

    def kernel(p_ref, t_ref, o_ref):
        if not need_mask:
            o_ref[...] = partial_sum(p_ref, t_ref, n_full_chunks, None)
        else:
            last = pl.num_programs(0) - 1

            @pl.when(pl.program_id(0) != last)
            def _():
                o_ref[...] = partial_sum(p_ref, t_ref, n_full_chunks, None)

            @pl.when(pl.program_id(0) == last)
            def _():
                o_ref[...] = partial_sum(p_ref, t_ref, n_last_chunks, valid_rows_last)

    return kernel


def l1_loss(pred, target):
    """Mean absolute error, matching torch.nn.L1Loss() (mean reduction)."""
    assert pred.shape == target.shape, "nn.L1Loss with equal shapes (no broadcast)"
    n = int(pred.size)
    dtype = pred.dtype
    if n == 0:
        return jnp.array(jnp.nan, dtype=dtype)
    itemsize = jnp.dtype(dtype).itemsize

    pf = pred.reshape(-1)
    tf = target.reshape(-1)

    rem = n % LANE
    n_main = n - rem

    tail = jnp.float32(0.0)
    if rem:
        # <128-element unaligned tail: tiny, summed in plain JAX (no O(n) pad copy).
        tail = jnp.sum(jnp.abs(pf[n_main:].astype(jnp.float32)
                               - tf[n_main:].astype(jnp.float32)))
    if n_main == 0:
        return (tail / jnp.float32(n)).astype(dtype)

    if rem:
        pf = pf[:n_main]
        tf = tf[:n_main]
    rows = n_main // LANE
    pm = pf.reshape(rows, LANE)
    tm = tf.reshape(rows, LANE)

    # --- tile selection (all static) -----------------------------------------
    sub = max(8, 32 // itemsize)                            # sublane pack for dtype
    budget_rows = INPUT_BUFFER_BUDGET // (4 * LANE * itemsize)  # 2 inputs x 2 bufs

    if rows <= CHUNK_ROWS:
        chunk = ((rows + sub - 1) // sub) * sub
        row_tile = chunk
    else:
        chunk = CHUNK_ROWS
        # >= 4 grid blocks (v7x megacore) while amortizing per-step overhead
        # with the largest tile that fits the VMEM budget.
        target_rows = -(-rows // 4)
        row_tile = ((target_rows + chunk - 1) // chunk) * chunk
        row_tile = max(chunk, min(row_tile, budget_rows))

    num_blocks = -(-rows // row_tile)
    valid_rows_last = rows - (num_blocks - 1) * row_tile

    kernel = _make_l1_partial_kernel(row_tile, chunk, valid_rows_last)

    partials = pl.pallas_call(
        kernel,
        out_shape=jax.ShapeDtypeStruct((num_blocks, 8, LANE), jnp.float32),
        grid_spec=pltpu.PrefetchScalarGridSpec(
            num_scalar_prefetch=0,
            grid=(num_blocks,),
            in_specs=[
                pl.BlockSpec((row_tile, LANE), lambda i: (i, 0)),
                pl.BlockSpec((row_tile, LANE), lambda i: (i, 0)),
            ],
            # Leading dim squeezed: each grid step owns its own (8,128) slab,
            # so there is no serialized accumulator and the axis is megacore-safe.
            out_specs=pl.BlockSpec((None, 8, LANE), lambda i: (i, 0, 0)),
        ),
        compiler_params=pltpu.CompilerParams(
            dimension_semantics=("parallel",),
            vmem_limit_bytes=VMEM_LIMIT_BYTES,
        ),
        cost_estimate=pl.CostEstimate(
            flops=3 * n_main,
            transcendentals=0,
            bytes_accessed=2 * n_main * itemsize + num_blocks * 8 * LANE * 4,
        ),
    )(pm, tm)

    total = jnp.sum(partials, dtype=jnp.float32) + tail
    return (total / jnp.float32(n)).astype(dtype)


if __name__ == "__main__":
    key = jax.random.PRNGKey(0)
    k_pred, k_tgt = jax.random.split(key)

    shape = (2, 4, 16, 16)  # NCHW, small synthetic input
    pred = jax.random.normal(k_pred, shape, dtype=jnp.float32)
    target = jax.random.normal(k_tgt, shape, dtype=jnp.float32)

    loss = jax.block_until_ready(l1_loss(pred, target))

    # Reference check against plain JAX (same math as nn.L1Loss, mean reduction).
    ref = jnp.mean(jnp.abs(pred - target))
    assert jnp.allclose(loss, ref, rtol=1e-5, atol=1e-6), (loss, ref)

    print("KERNEL_OK")
</pallas_src>

<mosaic_0001>
module attributes {stable_mosaic.version = 11 : i64} {
  func.func @kernel(%arg0: i32, %arg1: memref<16x128xf32, #tpu.memory_space<vmem>>, %arg2: memref<16x128xf32, #tpu.memory_space<vmem>>, %arg3: memref<1x8x128xf32, #tpu.memory_space<vmem>>) attributes {dimension_semantics = [#tpu.dimension_semantics<parallel>], iteration_bounds = array<i64: 1>, scalar_prefetch = 0 : i64, scratch_operands = 0 : i64, tpu.core_type = #tpu.core_type<tc>, window_params = [{transform_indices = @transform_0, window_bounds = array<i64: 16, 128>}, {transform_indices = @transform_1, window_bounds = array<i64: 16, 128>}, {transform_indices = @transform_2, window_bounds = array<i64: 1, 8, 128>}]} {
    %cst = arith.constant 0.000000e+00 : f32
    %0 = vector.broadcast %cst : f32 to vector<8x128xf32>
    %c0_i32 = arith.constant 0 : i32
    %c16_i32 = arith.constant 16 : i32
    %1 = arith.muli %c0_i32, %c16_i32 : i32
    %2 = tpu.assume_multiple %1, 16 : i32
    %3 = arith.index_cast %2 : i32 to index
    %c0 = arith.constant 0 : index
    %4 = vector.load %arg1[%3, %c0] : memref<16x128xf32, #tpu.memory_space<vmem>>, vector<16x128xf32>
    %5 = arith.index_cast %2 : i32 to index
    %c0_0 = arith.constant 0 : index
    %6 = vector.load %arg2[%5, %c0_0] : memref<16x128xf32, #tpu.memory_space<vmem>>, vector<16x128xf32>
    %7 = arith.subf %4, %6 : vector<16x128xf32>
    %8 = math.absf %7 : vector<16x128xf32>
    %9 = vector.shape_cast %8 : vector<16x128xf32> to vector<2x8x128xf32>
    %cst_1 = arith.constant dense<0.000000e+00> : vector<8x128xf32>
    %10 = vector.multi_reduction <add>, %9, %cst_1 [0] : vector<2x8x128xf32> to vector<8x128xf32>
    %11 = arith.addf %0, %10 : vector<8x128xf32>
    %c1_i32 = arith.constant 1 : i32
    %c0_2 = arith.constant 0 : index
    %c0_3 = arith.constant 0 : index
    %c0_4 = arith.constant 0 : index
    %12 = vector.load %arg3[%c0_2, %c0_3, %c0_4] : memref<1x8x128xf32, #tpu.memory_space<vmem>>, vector<1x8x128xf32>
    %13 = vector.shape_cast %12 : vector<1x8x128xf32> to vector<8x128xf32>
    %14 = vector.shape_cast %11 : vector<8x128xf32> to vector<1x8x128xf32>
    tpu.vector_store %arg3[%c0_2, %c0_3, %c0_4], %14 {strides = array<i32>} : memref<1x8x128xf32, #tpu.memory_space<vmem>>, vector<1x8x128xf32>,
    return
  }
  func.func @transform_0(%arg0: i32) -> (i32, i32) {
    %c0_i32 = arith.constant 0 : i32
    %c0_i32_0 = arith.constant 0 : i32
    return %arg0, %c0_i32 : i32, i32
  }
  func.func @transform_1(%arg0: i32) -> (i32, i32) {
    %c0_i32 = arith.constant 0 : i32
    %c0_i32_0 = arith.constant 0 : i32
    return %arg0, %c0_i32 : i32, i32
  }
  func.func @transform_2(%arg0: i32) -> (i32, i32, i32) {
    %c0_i32 = arith.constant 0 : i32
    %c0_i32_0 = arith.constant 0 : i32
    %c0_i32_1 = arith.constant 0 : i32
    return %arg0, %c0_i32, %c0_i32_0 : i32, i32, i32
  }
}

</mosaic_0001>

<llo_original>
// kernel: tpu_custom_call.1
$region0: #{tpu_custom_call.1}
  #allocation0 [shape = 'u32[]', space=smem, size = 0x4, offset = 0x4, fixed_abs, tag = 'smem constant byte address 0x4 - core index']
  #allocation1 [shape = 'u32[72,128]{1,0:T(1,128)}', space=vmem, size = 0x9000, scoped, tag = 'internal scratch']
  %s0 = inlined_call_operand.hbm [shape: f32[16,128], index: 0, kind: input, shape index: {}]
  %s1 = inlined_call_operand.hbm [shape: f32[16,128], index: 1, kind: input, shape index: {}]
  %s2 = inlined_call_operand.hbm [shape: f32[1,8,128], index: 2, kind: output, shape index: {}]
  %s3 = sld [smem:[#allocation0]]
  $region26: #{tpu_custom_call.1} parent=0
    _
  %s5 = ssub.s32 1, %s3
  %s6 = scalar_select 0, %s5, %s3
  $region1: #{tpu_custom_call.1} parent=0
    #allocation2 [shape = 'u8[8192]{0}', space=vmem, size = 0x2000, scoped, tag = 'input window, operand 0, single buffered']
    #allocation3 [shape = 's32[1]{0}', space=sflag, size = 0x4, scoped, tag = 'scoped memory for tpu_custom_call.1']
    #allocation4 [shape = 's32[1]{0}', space=sflag, size = 0x4, scoped, tag = 'scoped memory for tpu_custom_call.1']
    #allocation5 [shape = 'u8[8192]{0}', space=vmem, size = 0x2000, scoped, tag = 'input window, operand 1, single buffered']
    #allocation6 [shape = 's32[1]{0}', space=sflag, size = 0x4, scoped, tag = 'scoped memory for tpu_custom_call.1']
    #allocation7 [shape = 'u8[4096]{0}', space=vmem, size = 0x1000, scoped, tag = 'output window, operand 0, single buffered']
    %7 = vsyncpa [#allocation3], 0
    %8 = vsyncpa [#allocation6], 0
    %9 = vsyncpa [#allocation4], 0
    // Predicated region
    $region2: #{tpu_custom_call.1} parent=1 // pred_check
      _
    $region3: #{tpu_custom_call.1} parent=1 // pred_check_branch
      %11 = sbr.rel (0) target = $region5
    $region4: #{tpu_custom_call.1} parent=1 // pred_region
      %13 = vsyncadd [#allocation3], 0
      %s14 = sshll.u32 %s0, 4
      %s15 = int_to_ptr.hbm [resolvable:$true] %s14
      %s16 = sshll.u32 [#allocation2], 4
      %s17 = int_to_ptr.vmem [resolvable:$true] %s16
      %22 = dma.hbm_to_vmem [thread:$0]  %s15, 256, %s17, [#allocation3], 128, 128, 8
    $region5: #{tpu_custom_call.1} parent=1 // pred_fallthru
      _
    // Predicated region
    $region6: #{tpu_custom_call.1} parent=1 // pred_check
      _
    $region7: #{tpu_custom_call.1} parent=1 // pred_check_branch
      %24 = sbr.rel (0) target = $region9
    $region8: #{tpu_custom_call.1} parent=1 // pred_region
      %26 = vsyncadd [#allocation6], 0
      %s27 = sshll.u32 %s1, 4
      %s28 = int_to_ptr.hbm [resolvable:$true] %s27
      %s29 = sshll.u32 [#allocation5], 4
      %s30 = int_to_ptr.vmem [resolvable:$true] %s29
      %35 = dma.hbm_to_vmem [thread:$0]  %s28, 256, %s30, [#allocation6], 128, 128, 8
    $region9: #{tpu_custom_call.1} parent=1 // pred_fallthru
      _
    // Predicated region
    $region10: #{tpu_custom_call.1} parent=1 // pred_check
      _
    $region11: #{tpu_custom_call.1} parent=1 // pred_check_branch
      %37 = sbr.rel (0) target = $region13
    $region12: #{tpu_custom_call.1} parent=1 // pred_region
      %39 = dma.done [#allocation3], 256
    $region13: #{tpu_custom_call.1} parent=1 // pred_fallthru
      _
    // Predicated region
    $region14: #{tpu_custom_call.1} parent=1 // pred_check
      _
    $region15: #{tpu_custom_call.1} parent=1 // pred_check_branch
      %41 = sbr.rel (0) target = $region17
    $region16: #{tpu_custom_call.1} parent=1 // pred_region
      %43 = dma.done [#allocation6], 256
    $region17: #{tpu_custom_call.1} parent=1 // pred_fallthru
      _
    %v44 = vld [vmem:[#allocation2] sm:$0xff]
    %v45 = vld [vmem:[#allocation2 + $0x8] sm:$0xff]
    %v46 = vld [vmem:[#allocation5] sm:$0xff]
    %v47 = vld [vmem:[#allocation5 + $0x8] sm:$0xff]
    %v48 = vsub.f32 %v44, %v46
    %v49 = vsub.f32 %v45, %v47
    %v50 = vand.u32 2147483647, %v48
    %v51 = vand.u32 2147483647, %v49
    %v52 = vadd.f32 %v50, %v51
    %v53 = vadd.f32 %v52, 0.0
    %54 = vst [vmem:[#allocation7] sm:$0xff] %v53
    // Predicated region
    $region18: #{tpu_custom_call.1} parent=1 // pred_check
      _
    $region19: #{tpu_custom_call.1} parent=1 // pred_check_branch
      %56 = sbr.rel (0) target = $region21
    $region20: #{tpu_custom_call.1} parent=1 // pred_region
      %58 = vsyncadd [#allocation4], 0
      %s60 = sshll.u32 [#allocation7], 4
      %s61 = int_to_ptr.vmem [resolvable:$true] %s60
      %s62 = sshll.u32 %s2, 4
      %s63 = int_to_ptr.hbm [resolvable:$true] %s62
      %65 = dma.vmem_to_hbm [thread:$0]  %s61, 128, %s63, [#allocation4]
    $region21: #{tpu_custom_call.1} parent=1 // pred_fallthru
      _
    // Predicated region
    $region22: #{tpu_custom_call.1} parent=1 // pred_check
      _
    $region23: #{tpu_custom_call.1} parent=1 // pred_check_branch
      %67 = sbr.rel (0) target = $region25
    $region24: #{tpu_custom_call.1} parent=1 // pred_region
      %69 = dma.done [#allocation4], 128
    $region25: #{tpu_custom_call.1} parent=1 // pred_fallthru
      _
    %70 = vsyncpa [#allocation3], 1
    %71 = vsyncpa [#allocation6], 1
    %72 = vsyncpa [#allocation4], 1

</llo_original>
